<compile_context>
chip_gen: v6e
topology: v6e:2x2x1
jax: 0.10.0
libtpu: 0.0.40
codegen_flags: <defaults>
</compile_context>

<pallas_src>
import functools

import jax
import jax.numpy as jnp
from jax import lax
from jax.experimental import pallas as pl
from jax.experimental.pallas import tpu as pltpu


def _ce_sum_kernel(logits_ref, tgt_ref, out_ref, acc_ref, *, ignore_idx: int,
                   s_total: int):
    si = pl.program_id(2)
    n_si = pl.num_programs(2)

    @pl.when(si == 0)
    def _():
        acc_ref[...] = jnp.zeros_like(acc_ref)

    x_raw = logits_ref[0].astype(jnp.float32)          # (C, tile_s) class on sublanes
    t = tgt_ref[0]                                      # (1, tile_s) int32
    c, tile_s = x_raw.shape

    # Global spatial block index (chunk-parallel axis folded in).
    blk = pl.program_id(1) * n_si + si
    needs_mask = (blk + 1) * tile_s > s_total           # partial or fully-OOB block

    def accumulate(x, extra_valid):
        # Numerically stable log-sum-exp over the class (sublane) axis.
        m = jnp.max(x, axis=0, keepdims=True)                       # (1, tile_s)
        lse = jnp.log(jnp.sum(jnp.exp(x - m), axis=0, keepdims=True)) + m
        # Target logit via select over the class axis (no per-lane gather,
        # no float one-hot / int->f32 cast).
        cls = lax.broadcasted_iota(jnp.int32, (c, tile_s), 0)
        tgt_logit = jnp.sum(jnp.where(cls == t, x, 0.0), axis=0, keepdims=True)
        valid = t != ignore_idx
        if extra_valid is not None:
            valid = jnp.logical_and(valid, extra_valid)
        acc_ref[...] += jnp.where(valid, lse - tgt_logit, 0.0)      # lane-wide f32 acc

    # Fast path: full in-range block — no iota / compare / select on x.
    @pl.when(jnp.logical_not(needs_mask))
    def _():
        accumulate(x_raw, None)

    # Slow path: last (partial) block of the spatial axis — mask OOB lanes
    # BEFORE exp so garbage bits can't produce NaN/Inf.
    @pl.when(needs_mask)
    def _():
        pos = blk * tile_s + lax.broadcasted_iota(jnp.int32, (1, tile_s), 1)
        in_range = pos < s_total
        accumulate(jnp.where(in_range, x_raw, 0.0), in_range)

    # Finalize once per (batch, chunk): single cross-lane reduction + store.
    @pl.when(si == n_si - 1)
    def _():
        out_ref[...] = jnp.broadcast_to(jnp.sum(acc_ref[...]), out_ref.shape)


def _vmem_plan():
    """(tile budget bytes, scoped vmem limit bytes, max tile lanes) per chip gen."""
    cap = None
    try:
        cap = getattr(pltpu.get_tpu_info(), "vmem_capacity_bytes", None)
    except Exception:
        cap = None
    if cap is None:
        cap = 64 * 1024 * 1024                 # conservative: assume smallest (v7x)
    if cap <= 64 * 1024 * 1024:
        # v7x: 64 MiB / TC — leave headroom for Mosaic internal scratch.
        return 20 * 1024 * 1024, 32 * 1024 * 1024, 16384
    # v5e / v6e: 128 MiB — bigger tiles, fewer per-step overheads.
    return 48 * 1024 * 1024, 64 * 1024 * 1024, 32768


def _pick_tile_s(s: int, c: int, logits_itemsize: int, budget_bytes: int,
                 max_lanes: int) -> int:
    # Sublane padding of the (C, tile_s) logits block.
    if logits_itemsize >= 4:
        sub = 8
    elif logits_itemsize == 2:
        sub = 16
    else:
        sub = 32
    padded_c = -(-c // sub) * sub
    # Per lane: double-buffered logits block + double-buffered int32 target
    # block + f32 lane accumulator + ~5 full-size (C_padded, tile_s) f32
    # compiler temporaries (upcast/select x, class iota, exp, select, partials).
    per_lane = 2 * (padded_c * logits_itemsize + 4) + 4 + 5 * padded_c * 4
    max_tile = min(max(128, budget_bytes // per_lane), max_lanes)
    if s <= max_tile:
        return s                                 # full spatial dim: always legal
    return max(128, (max_tile // 128) * 128)     # lane-dense multiple of 128


def ce_loss_sum(prediction, target, ignore_idx: int, *,
                tile_s_override: int | None = None,
                n_chunks: int | None = None):
    """CrossEntropyLoss(ignore_index=ignore_idx, reduction='sum').

    prediction: (N, C, H, W) float logits (NCHW, PyTorch convention; f32 or bf16)
    target:     (N, H, W)    int class indices (ignore_idx entries are skipped)
    returns:    scalar float32
    """
    n, c, h, w = prediction.shape
    s = h * w

    logits3 = prediction.reshape(n, c, s)                # contiguous; no HBM transpose
    tgt3 = target.reshape(n, 1, s).astype(jnp.int32)     # lane-dense target blocks

    budget, limit, max_lanes = _vmem_plan()
    tile_s = tile_s_override or _pick_tile_s(
        s, c, jnp.dtype(prediction.dtype).itemsize, budget, max_lanes)
    grid_s = pl.cdiv(s, tile_s)

    # Second parallel axis over spatial chunks so both v7x TCs stay busy when
    # N is 1 / odd; single-TC generations are unaffected.
    if n_chunks is None:
        n_chunks = 2 if (n % 2 == 1 and grid_s >= 2) else 1
    n_chunks = max(1, min(n_chunks, grid_s))
    steps_per_chunk = pl.cdiv(grid_s, n_chunks)

    kernel = functools.partial(_ce_sum_kernel, ignore_idx=ignore_idx, s_total=s)

    def spatial_blk(ch, si):
        # Clamp fully-out-of-range blocks (uneven chunk split) to the last
        # valid block; the kernel masks their contribution to zero anyway.
        return jnp.minimum(ch * steps_per_chunk + si, grid_s - 1)

    out = pl.pallas_call(
        kernel,
        out_shape=jax.ShapeDtypeStruct((n * n_chunks, 1, 128), jnp.float32),
        grid_spec=pltpu.PrefetchScalarGridSpec(
            num_scalar_prefetch=0,
            grid=(n, n_chunks, steps_per_chunk),
            in_specs=[
                pl.BlockSpec((1, c, tile_s),
                             lambda b, ch, si: (b, 0, spatial_blk(ch, si))),
                pl.BlockSpec((1, 1, tile_s),
                             lambda b, ch, si: (b, 0, spatial_blk(ch, si))),
            ],
            out_specs=pl.BlockSpec((1, 1, 128),
                                   lambda b, ch, si: (b * n_chunks + ch, 0, 0)),
            scratch_shapes=[pltpu.VMEM((1, tile_s), jnp.float32)],
        ),
        compiler_params=pltpu.CompilerParams(
            # batch + chunk axes parallel (each owns its own output slot, no
            # race); innermost spatial axis is the reduction.
            dimension_semantics=("parallel", "parallel", "arbitrary"),
            vmem_limit_bytes=limit,
        ),
    )(logits3, tgt3)

    # Lane 0 of each (batch, chunk) slot holds that slot's partial sum.
    return jnp.sum(out[:, 0, 0])


def _reference_ce_sum(prediction, target, ignore_idx):
    n, c, h, w = prediction.shape
    logits = jnp.transpose(prediction, (0, 2, 3, 1)).reshape(-1, c).astype(jnp.float32)
    tgt = target.reshape(-1).astype(jnp.int32)
    m = jnp.max(logits, axis=-1, keepdims=True)
    lse = jnp.squeeze(jnp.log(jnp.sum(jnp.exp(logits - m), axis=-1, keepdims=True)) + m, -1)
    tgt_safe = jnp.where(tgt == ignore_idx, 0, tgt)
    tgt_logit = jnp.take_along_axis(logits, tgt_safe[:, None], axis=-1)[:, 0]
    loss = jnp.where(tgt == ignore_idx, 0.0, lse - tgt_logit)
    return jnp.sum(loss)


if __name__ == "__main__":
    ignore_idx = -1
    key = jax.random.PRNGKey(0)

    # --- Test 1: segmentation-style CE, f32, natural tiling --------------------
    k1, k2, k3, key = jax.random.split(key, 4)
    N, C, H, W = 2, 4, 16, 16
    prediction = jax.random.normal(k1, (N, C, H, W), dtype=jnp.float32)
    target = jax.random.randint(k2, (N, H, W), 0, C, dtype=jnp.int32)
    target = jnp.where(jax.random.uniform(k3, (N, H, W)) < 0.2, ignore_idx, target)

    loss = jax.block_until_ready(ce_loss_sum(prediction, target, ignore_idx))
    ref = jax.block_until_ready(_reference_ce_sum(prediction, target, ignore_idx))
    assert jnp.allclose(loss, ref, rtol=1e-5, atol=1e-4), (loss, ref)

    # --- Test 2: N=1, non-multiple-of-128 spatial, forced small tile ----------
    # exercises the chunk-parallel axis, partial-block masking and clamping.
    k1, k2, k3, key = jax.random.split(key, 4)
    N2, C2, H2, W2 = 1, 4, 19, 23
    pred2 = jax.random.normal(k1, (N2, C2, H2, W2), dtype=jnp.float32)
    tgt2 = jax.random.randint(k2, (N2, H2, W2), 0, C2, dtype=jnp.int32)
    tgt2 = jnp.where(jax.random.uniform(k3, (N2, H2, W2)) < 0.2, ignore_idx, tgt2)

    loss2 = jax.block_until_ready(
        ce_loss_sum(pred2, tgt2, ignore_idx, tile_s_override=128))
    ref2 = jax.block_until_ready(_reference_ce_sum(pred2, tgt2, ignore_idx))
    assert jnp.allclose(loss2, ref2, rtol=1e-5, atol=1e-4), (loss2, ref2)

    # --- Test 3: bf16 logits path (halves HBM traffic; f32 LSE in-kernel) -----
    pred_bf16 = prediction.astype(jnp.bfloat16)
    loss3 = jax.block_until_ready(ce_loss_sum(pred_bf16, target, ignore_idx))
    ref3 = jax.block_until_ready(_reference_ce_sum(pred_bf16, target, ignore_idx))
    assert jnp.allclose(loss3, ref3, rtol=1e-4, atol=1e-3), (loss3, ref3)

    print("KERNEL_OK")
</pallas_src>

<mosaic_0001>
module attributes {stable_mosaic.version = 11 : i64} {
  func.func @_ce_sum_kernel(%arg0: i32, %arg1: i32, %arg2: i32, %arg3: memref<1x4x256xf32, #tpu.memory_space<vmem>>, %arg4: memref<1x1x256xi32, #tpu.memory_space<vmem>>, %arg5: memref<1x1x128xf32, #tpu.memory_space<vmem>>, %arg6: memref<1x256xf32, #tpu.memory_space<vmem>>) attributes {dimension_semantics = [#tpu.dimension_semantics<parallel>, #tpu.dimension_semantics<parallel>, #tpu.dimension_semantics<arbitrary>], iteration_bounds = array<i64: 2, 1, 1>, scalar_prefetch = 0 : i64, scratch_operands = 1 : i64, tpu.core_type = #tpu.core_type<tc>, window_params = [{transform_indices = @transform_0, window_bounds = array<i64: 1, 4, 256>}, {transform_indices = @transform_1, window_bounds = array<i64: 1, 1, 256>}, {transform_indices = @transform_2, window_bounds = array<i64: 1, 1, 128>}]} {
    %c0_i32 = arith.constant 0 : i32
    %0 = arith.cmpi eq, %arg2, %c0_i32 : i32
    %1 = arith.extui %0 : i1 to i32
    %c0_i32_0 = arith.constant 0 : i32
    %2 = arith.cmpi ne, %1, %c0_i32_0 : i32
    scf.if %2 {
      %cst = arith.constant 0.000000e+00 : f32
      %20 = vector.broadcast %cst : f32 to vector<1x256xf32>
      %c0_12 = arith.constant 0 : index
      %c0_13 = arith.constant 0 : index
      %21 = vector.load %arg6[%c0_12, %c0_13] : memref<1x256xf32, #tpu.memory_space<vmem>>, vector<1x256xf32>
      tpu.vector_store %arg6[%c0_12, %c0_13], %20 {strides = array<i32>} : memref<1x256xf32, #tpu.memory_space<vmem>>, vector<1x256xf32>,
    } else {
    }
    %c0 = arith.constant 0 : index
    %c0_1 = arith.constant 0 : index
    %c0_2 = arith.constant 0 : index
    %3 = vector.load %arg3[%c0, %c0_1, %c0_2] : memref<1x4x256xf32, #tpu.memory_space<vmem>>, vector<1x4x256xf32>
    %4 = vector.shape_cast %3 : vector<1x4x256xf32> to vector<4x256xf32>
    %c0_3 = arith.constant 0 : index
    %c0_4 = arith.constant 0 : index
    %c0_5 = arith.constant 0 : index
    %5 = vector.load %arg4[%c0_3, %c0_4, %c0_5] : memref<1x1x256xi32, #tpu.memory_space<vmem>>, vector<1x1x256xi32>
    %6 = vector.shape_cast %5 : vector<1x1x256xi32> to vector<1x256xi32>
    %c1_i32 = arith.constant 1 : i32
    %7 = arith.muli %arg1, %c1_i32 : i32
    %8 = arith.addi %7, %arg2 : i32
    %c1_i32_6 = arith.constant 1 : i32
    %9 = arith.addi %8, %c1_i32_6 : i32
    %c256_i32 = arith.constant 256 : i32
    %10 = arith.muli %9, %c256_i32 : i32
    %c256_i32_7 = arith.constant 256 : i32
    %11 = arith.cmpi sgt, %10, %c256_i32_7 : i32
    %true = arith.constant true
    %12 = arith.xori %11, %true : i1
    %13 = arith.extui %12 : i1 to i32
    %c0_i32_8 = arith.constant 0 : i32
    %14 = arith.cmpi ne, %13, %c0_i32_8 : i32
    scf.if %14 {
      %cst = arith.constant dense<0xFF800000> : vector<256xf32>
      %20 = vector.multi_reduction <maximumf>, %4, %cst [0] : vector<4x256xf32> to vector<256xf32>
      %21 = vector.shape_cast %20 : vector<256xf32> to vector<1x256xf32>
      %22 = vector.broadcast %21 : vector<1x256xf32> to vector<4x256xf32>
      %23 = arith.subf %4, %22 : vector<4x256xf32>
      %24 = math.exp %23 : vector<4x256xf32>
      %cst_12 = arith.constant dense<0.000000e+00> : vector<256xf32>
      %25 = vector.multi_reduction <add>, %24, %cst_12 [0] : vector<4x256xf32> to vector<256xf32>
      %26 = vector.shape_cast %25 : vector<256xf32> to vector<1x256xf32>
      %27 = math.log %26 : vector<1x256xf32>
      %28 = arith.addf %27, %21 : vector<1x256xf32>
      %29 = tpu.iota {dimensions = array<i32: 0>} : vector<4x256xi32>
      %30 = vector.broadcast %6 : vector<1x256xi32> to vector<4x256xi32>
      %31 = arith.cmpi eq, %29, %30 : vector<4x256xi32>
      %cst_13 = arith.constant 0.000000e+00 : f32
      %32 = vector.broadcast %cst_13 : f32 to vector<4x256xf32>
      %33 = arith.select %31, %4, %32 : vector<4x256xi1>, vector<4x256xf32>
      %cst_14 = arith.constant dense<0.000000e+00> : vector<256xf32>
      %34 = vector.multi_reduction <add>, %33, %cst_14 [0] : vector<4x256xf32> to vector<256xf32>
      %35 = vector.shape_cast %34 : vector<256xf32> to vector<1x256xf32>
      %c-1_i32 = arith.constant -1 : i32
      %36 = vector.broadcast %c-1_i32 : i32 to vector<1x256xi32>
      %37 = arith.cmpi ne, %6, %36 : vector<1x256xi32>
      %c0_15 = arith.constant 0 : index
      %c0_16 = arith.constant 0 : index
      %38 = vector.load %arg6[%c0_15, %c0_16] : memref<1x256xf32, #tpu.memory_space<vmem>>, vector<1x256xf32>
      %39 = arith.subf %28, %35 : vector<1x256xf32>
      %cst_17 = arith.constant 0.000000e+00 : f32
      %40 = vector.broadcast %cst_17 : f32 to vector<1x256xf32>
      %41 = arith.select %37, %39, %40 : vector<1x256xi1>, vector<1x256xf32>
      %42 = arith.addf %38, %41 : vector<1x256xf32>
      %c0_18 = arith.constant 0 : index
      %c0_19 = arith.constant 0 : index
      %43 = vector.load %arg6[%c0_18, %c0_19] : memref<1x256xf32, #tpu.memory_space<vmem>>, vector<1x256xf32>
      tpu.vector_store %arg6[%c0_18, %c0_19], %42 {strides = array<i32>} : memref<1x256xf32, #tpu.memory_space<vmem>>, vector<1x256xf32>,
    } else {
    }
    %15 = arith.extui %11 : i1 to i32
    %c0_i32_9 = arith.constant 0 : i32
    %16 = arith.cmpi ne, %15, %c0_i32_9 : i32
    scf.if %16 {
      %c256_i32_12 = arith.constant 256 : i32
      %20 = arith.muli %8, %c256_i32_12 : i32
      %21 = tpu.iota {dimensions = array<i32: 1>} : vector<1x256xi32>
      %22 = vector.broadcast %20 : i32 to vector<1x256xi32>
      %23 = arith.addi %22, %21 : vector<1x256xi32>
      %c256_i32_13 = arith.constant 256 : i32
      %24 = vector.broadcast %c256_i32_13 : i32 to vector<1x256xi32>
      %25 = arith.cmpi slt, %23, %24 : vector<1x256xi32>
      %cst = arith.constant 0.000000e+00 : f32
      %26 = vector.shape_cast %25 : vector<1x256xi1> to vector<1x256xi1>
      %27 = vector.broadcast %26 : vector<1x256xi1> to vector<4x256xi1>
      %28 = vector.broadcast %cst : f32 to vector<4x256xf32>
      %29 = arith.select %27, %4, %28 : vector<4x256xi1>, vector<4x256xf32>
      %cst_14 = arith.constant dense<0xFF800000> : vector<256xf32>
      %30 = vector.multi_reduction <maximumf>, %29, %cst_14 [0] : vector<4x256xf32> to vector<256xf32>
      %31 = vector.shape_cast %30 : vector<256xf32> to vector<1x256xf32>
      %32 = vector.broadcast %31 : vector<1x256xf32> to vector<4x256xf32>
      %33 = arith.subf %29, %32 : vector<4x256xf32>
      %34 = math.exp %33 : vector<4x256xf32>
      %cst_15 = arith.constant dense<0.000000e+00> : vector<256xf32>
      %35 = vector.multi_reduction <add>, %34, %cst_15 [0] : vector<4x256xf32> to vector<256xf32>
      %36 = vector.shape_cast %35 : vector<256xf32> to vector<1x256xf32>
      %37 = math.log %36 : vector<1x256xf32>
      %38 = arith.addf %37, %31 : vector<1x256xf32>
      %39 = tpu.iota {dimensions = array<i32: 0>} : vector<4x256xi32>
      %40 = vector.broadcast %6 : vector<1x256xi32> to vector<4x256xi32>
      %41 = arith.cmpi eq, %39, %40 : vector<4x256xi32>
      %cst_16 = arith.constant 0.000000e+00 : f32
      %42 = vector.broadcast %cst_16 : f32 to vector<4x256xf32>
      %43 = arith.select %41, %29, %42 : vector<4x256xi1>, vector<4x256xf32>
      %cst_17 = arith.constant dense<0.000000e+00> : vector<256xf32>
      %44 = vector.multi_reduction <add>, %43, %cst_17 [0] : vector<4x256xf32> to vector<256xf32>
      %45 = vector.shape_cast %44 : vector<256xf32> to vector<1x256xf32>
      %c-1_i32 = arith.constant -1 : i32
      %46 = vector.broadcast %c-1_i32 : i32 to vector<1x256xi32>
      %47 = arith.cmpi ne, %6, %46 : vector<1x256xi32>
      %48 = arith.andi %47, %25 : vector<1x256xi1>
      %c0_18 = arith.constant 0 : index
      %c0_19 = arith.constant 0 : index
      %49 = vector.load %arg6[%c0_18, %c0_19] : memref<1x256xf32, #tpu.memory_space<vmem>>, vector<1x256xf32>
      %50 = arith.subf %38, %45 : vector<1x256xf32>
      %cst_20 = arith.constant 0.000000e+00 : f32
      %51 = vector.broadcast %cst_20 : f32 to vector<1x256xf32>
      %52 = arith.select %48, %50, %51 : vector<1x256xi1>, vector<1x256xf32>
      %53 = arith.addf %49, %52 : vector<1x256xf32>
      %c0_21 = arith.constant 0 : index
      %c0_22 = arith.constant 0 : index
      %54 = vector.load %arg6[%c0_21, %c0_22] : memref<1x256xf32, #tpu.memory_space<vmem>>, vector<1x256xf32>
      tpu.vector_store %arg6[%c0_21, %c0_22], %53 {strides = array<i32>} : memref<1x256xf32, #tpu.memory_space<vmem>>, vector<1x256xf32>,
    } else {
    }
    %c0_i32_10 = arith.constant 0 : i32
    %17 = arith.cmpi eq, %arg2, %c0_i32_10 : i32
    %18 = arith.extui %17 : i1 to i32
    %c0_i32_11 = arith.constant 0 : i32
    %19 = arith.cmpi ne, %18, %c0_i32_11 : i32
    scf.if %19 {
      %c0_12 = arith.constant 0 : index
      %c0_13 = arith.constant 0 : index
      %20 = vector.load %arg6[%c0_12, %c0_13] : memref<1x256xf32, #tpu.memory_space<vmem>>, vector<1x256xf32>
      %21 = vector.shape_cast %20 : vector<1x256xf32> to vector<1x1x256xf32>
      %cst = arith.constant dense<0.000000e+00> : vector<1xf32>
      %22 = vector.multi_reduction <add>, %21, %cst [1, 2] : vector<1x1x256xf32> to vector<1xf32>
      %23 = vector.shape_cast %22 : vector<1xf32> to vector<1x1x1xf32>
      %24 = vector.extract %23[0, 0, 0] : f32 from vector<1x1x1xf32>
      %25 = vector.broadcast %24 : f32 to vector<1x1x128xf32>
      %c0_14 = arith.constant 0 : index
      %c0_15 = arith.constant 0 : index
      %c0_16 = arith.constant 0 : index
      %26 = vector.load %arg5[%c0_14, %c0_15, %c0_16] : memref<1x1x128xf32, #tpu.memory_space<vmem>>, vector<1x1x128xf32>
      tpu.vector_store %arg5[%c0_14, %c0_15, %c0_16], %25 {strides = array<i32>} : memref<1x1x128xf32, #tpu.memory_space<vmem>>, vector<1x1x128xf32>,
    } else {
    }
    return
  }
  func.func @transform_0(%arg0: i32, %arg1: i32, %arg2: i32) -> (i32, i32, i32) {
    %c1_i32 = arith.constant 1 : i32
    %0 = arith.muli %arg1, %c1_i32 : i32
    %1 = arith.addi %0, %arg2 : i32
    %c0_i32 = arith.constant 0 : i32
    %2 = arith.minsi %1, %c0_i32 : i32
    %c0_i32_0 = arith.constant 0 : i32
    %c0_i32_1 = arith.constant 0 : i32
    return %arg0, %c0_i32_0, %2 : i32, i32, i32
  }
  func.func @transform_1(%arg0: i32, %arg1: i32, %arg2: i32) -> (i32, i32, i32) {
    %c1_i32 = arith.constant 1 : i32
    %0 = arith.muli %arg1, %c1_i32 : i32
    %1 = arith.addi %0, %arg2 : i32
    %c0_i32 = arith.constant 0 : i32
    %2 = arith.minsi %1, %c0_i32 : i32
    %c0_i32_0 = arith.constant 0 : i32
    %c0_i32_1 = arith.constant 0 : i32
    return %arg0, %c0_i32_0, %2 : i32, i32, i32
  }
  func.func @transform_2(%arg0: i32, %arg1: i32, %arg2: i32) -> (i32, i32, i32) {
    %c1_i32 = arith.constant 1 : i32
    %0 = arith.muli %arg0, %c1_i32 : i32
    %1 = arith.addi %0, %arg1 : i32
    %c0_i32 = arith.constant 0 : i32
    %c0_i32_0 = arith.constant 0 : i32
    %c0_i32_1 = arith.constant 0 : i32
    return %1, %c0_i32, %c0_i32_0 : i32, i32, i32
  }
}

</mosaic_0001>

<llo_original>
// kernel: tpu_custom_call.1
$region0: #{tpu_custom_call.1}
  #allocation0 [shape = 'u32[]', space=smem, size = 0x4, offset = 0x4, fixed_abs, tag = 'smem constant byte address 0x4 - core index']
  #allocation1 [shape = 'u32[144,128]{1,0:T(1,128)}', space=vmem, size = 0x12000, scoped, tag = 'internal scratch']
  #allocation2 [shape = 'f32[1,256]{1,0:T(1,128)}', space=vmem, size = 0x400, scoped, tag = 'scratch operand']
  %s0 = inlined_call_operand.hbm [shape: f32[2,4,256], index: 0, kind: input, shape index: {}]
  %s1 = inlined_call_operand.hbm [shape: s32[2,1,256], index: 1, kind: input, shape index: {}]
  %s2 = inlined_call_operand.hbm [shape: f32[2,1,128], index: 2, kind: output, shape index: {}]
  %s3 = sld [smem:[#allocation0]]
  $region65: #{tpu_custom_call.1} parent=0
    _
  %s5 = ssub.s32 1, %s3
  %s6 = scalar_select 0, %s5, %s3
  $region1: #{tpu_custom_call.1} parent=0
    #allocation3 [shape = 'u8[8192]{0}', space=vmem, size = 0x2000, scoped, tag = 'input window, operand 0']
    #allocation4 [shape = 's32[2]{0}', space=sflag, size = 0x8, scoped, tag = 'scoped memory for tpu_custom_call.1']
    #allocation5 [shape = 's32[2]{0}', space=sflag, size = 0x8, scoped, tag = 'scoped memory for tpu_custom_call.1']
    #allocation6 [shape = 'u8[2048]{0}', space=vmem, size = 0x800, scoped, tag = 'input window, operand 1']
    #allocation7 [shape = 's32[2]{0}', space=sflag, size = 0x8, scoped, tag = 'scoped memory for tpu_custom_call.1']
    #allocation8 [shape = 'u8[1024]{0}', space=vmem, size = 0x400, scoped, tag = 'output window, operand 0']
    %7 = vsyncpa [#allocation4], 0
    %s8 = scalar_lea.sflag [#allocation4], 1
    %9 = vsyncpa %s8, 0
    %10 = vsyncpa [#allocation7], 0
    %s11 = scalar_lea.sflag [#allocation7], 1
    %12 = vsyncpa %s11, 0
    %13 = vsyncpa [#allocation5], 0
    %s14 = scalar_lea.sflag [#allocation5], 1
    %15 = vsyncpa %s14, 0
    loop: start=0, step=1, limit=4
    $region2: #{tpu_custom_call.1} parent=1 // loop_pre_header
      _
    $region3: #{tpu_custom_call.1} parent=1 // loop_header
      %s17 = sphi 0, %s21
      %p18 = scmp.ge.s32.totalorder %s17, 4
      %s24 = sphi 0, %s43
      %s25 = sphi 0, %s39
      %s26 = sphi 0, %s35
      %s27 = sphi 0, %s24
      %s28 = sphi 0, %s25
      %s29 = sphi 0, %s26
      %s30 = sphi 0, %s27
      %s31 = sphi 0, %s28
      %s32 = sphi 0, %s29
      %s54 = sphi 0, %s56
      %s57 = sphi 0, %s54
      %s58 = sphi 0, %s57
      %s74 = sphi 0, %s58
      %s88 = sphi 0, %s90
      %s91 = sphi 0, %s88
      %s92 = sphi 0, %s91
      %s108 = sphi 0, %s92
      %s116 = sphi 0, %s118
      %s119 = sphi 0, %s116
      %s120 = sphi 0, %s119
      %s136 = sphi 0, %s120
    $region4: #{tpu_custom_call.1} parent=1 // loop_header_branch
      %20 = sbr.rel (%p18) target = $region8
    $region5: #{tpu_custom_call.1} parent=1 // loop_body
      %s22 = ssub.s32 %s17, 1
      %s23 = ssub.s32 %s17, 2
      %s33 = sadd.s32 1, %s26
      %p34 = scmp.ge.s32.totalorder %s33, 1
      %s35 = scalar_select %p34, 0, %s33
      %s36 = sadd.s32 1, %s25
      %s37 = scalar_select %p34, %s36, %s25
      %p38 = scmp.ge.s32.totalorder %s37, 1
      %s39 = scalar_select %p38, 0, %s37
      %s40 = sadd.s32 1, %s24
      %s41 = scalar_select %p38, %s40, %s24
      %p42 = scmp.ge.s32.totalorder %s41, 2
      %s43 = scalar_select %p42, 0, %s41
      %s44 = sadd.s32 %s25, %s26
      %p45 = scmp.lt.s32.totalorder %s44, 0
      %s46 = scalar_select %p45, %s44, 0
      %s47 = sadd.s32 %s39, %s35
      %p48 = scmp.lt.s32.totalorder %s47, 0
      %s49 = scalar_select %p48, %s47, 0
      %s50 = ssub.s32 %s24, %s43
      %s51 = ssub.s32 %s46, %s49
      %s52 = sor.u32 %s50, %s51
      %p53 = scmp.eq.s32.totalorder %s52, 0
      %s55 = sadd.s32 %s54, 1
      %s56 = scalar_select %p53, %s54, %s55
      %p59 = pneg %p53
      %p60 = scmp.eq.s32.totalorder %s17, 1
      %p61 = por %p59, %p60
      %p62 = scmp.ne.s32.totalorder %s54, %s57
      %p63 = scmp.eq.s32.totalorder %s17, 0
      %p64 = por %p62, %p63
      %p65 = scmp.ne.s32.totalorder %s54, %s57
      %p66 = scmp.eq.s32.totalorder %s22, 1
      %p67 = por %p65, %p66
      %p68 = scmp.ne.s32.totalorder %s57, %s58
      %p69 = scmp.eq.s32.totalorder %s22, 0
      %p70 = por %p68, %p69
      %p71 = scmp.ne.s32.totalorder %s57, %s58
      %p72 = scmp.eq.s32.totalorder %s23, 1
      %p73 = por %p71, %p72
      %p75 = scmp.ne.s32.totalorder %s58, %s74
      %p76 = scmp.eq.s32.totalorder %s23, 0
      %p77 = por %p75, %p76
      %s78 = sadd.s32 %s25, %s26
      %p79 = scmp.lt.s32.totalorder %s78, 0
      %s80 = scalar_select %p79, %s78, 0
      %s81 = sadd.s32 %s39, %s35
      %p82 = scmp.lt.s32.totalorder %s81, 0
      %s83 = scalar_select %p82, %s81, 0
      %s84 = ssub.s32 %s24, %s43
      %s85 = ssub.s32 %s80, %s83
      %s86 = sor.u32 %s84, %s85
      %p87 = scmp.eq.s32.totalorder %s86, 0
      %s89 = sadd.s32 %s88, 1
      %s90 = scalar_select %p87, %s88, %s89
      %p93 = pneg %p87
      %p94 = scmp.eq.s32.totalorder %s17, 1
      %p95 = por %p93, %p94
      %p96 = scmp.ne.s32.totalorder %s88, %s91
      %p97 = scmp.eq.s32.totalorder %s17, 0
      %p98 = por %p96, %p97
      %p99 = scmp.ne.s32.totalorder %s88, %s91
      %p100 = scmp.eq.s32.totalorder %s22, 1
      %p101 = por %p99, %p100
      %p102 = scmp.ne.s32.totalorder %s91, %s92
      %p103 = scmp.eq.s32.totalorder %s22, 0
      %p104 = por %p102, %p103
      %p105 = scmp.ne.s32.totalorder %s91, %s92
      %p106 = scmp.eq.s32.totalorder %s23, 1
      %p107 = por %p105, %p106
      %p109 = scmp.ne.s32.totalorder %s92, %s108
      %p110 = scmp.eq.s32.totalorder %s23, 0
      %p111 = por %p109, %p110
      %s112 = sadd.s32 %s24, %s25
      %s113 = sadd.s32 %s43, %s39
      %s114 = ssub.s32 %s112, %s113
      %p115 = scmp.eq.s32.totalorder %s114, 0
      %s117 = sadd.s32 %s116, 1
      %s118 = scalar_select %p115, %s116, %s117
      %p121 = pneg %p115
      %p122 = scmp.eq.s32.totalorder %s17, 1
      %p123 = por %p121, %p122
      %p124 = scmp.ne.s32.totalorder %s116, %s119
      %p125 = scmp.eq.s32.totalorder %s17, 0
      %p126 = por %p124, %p125
      %p127 = scmp.ne.s32.totalorder %s116, %s119
      %p128 = scmp.eq.s32.totalorder %s22, 1
      %p129 = por %p127, %p128
      %p130 = scmp.ne.s32.totalorder %s119, %s120
      %p131 = scmp.eq.s32.totalorder %s22, 0
      %p132 = por %p130, %p131
      %p133 = scmp.ne.s32.totalorder %s119, %s120
      %p134 = scmp.eq.s32.totalorder %s23, 1
      %p135 = por %p133, %p134
      %p137 = scmp.ne.s32.totalorder %s120, %s136
      %p138 = scmp.eq.s32.totalorder %s23, 0
      %p139 = por %p137, %p138
      %p140 = scmp.le.s32.totalorder 1, %s17
      %p141 = scmp.lt.s32.totalorder %s17, 3
      %p142 = pnand %p140, %p141
      %p143 = pneg %p142
      // Predicated region
      $region9: #{tpu_custom_call.1} parent=5 // pred_check
        _
      $region10: #{tpu_custom_call.1} parent=5 // pred_check_branch
        %145 = sbr.rel (%p142) target = $region12
      $region11: #{tpu_custom_call.1} parent=5 // pred_region
        %s146 = ssub.s32 %s17, 1
      $region12: #{tpu_custom_call.1} parent=5 // pred_fallthru
        _
      %p147 = scmp.lt.s32.totalorder %s17, 2
      // Predicated region
      $region13: #{tpu_custom_call.1} parent=5 // pred_check
        %p148 = pneg %p147
      $region14: #{tpu_custom_call.1} parent=5 // pred_check_branch
        %150 = sbr.rel (%p148) target = $region16
      $region15: #{tpu_custom_call.1} parent=5 // pred_region
        // Predicated region
        $region17: #{tpu_custom_call.1} parent=15 // pred_check
          %p151 = pneg %p64
        $region18: #{tpu_custom_call.1} parent=15 // pred_check_branch
          %153 = sbr.rel (%p151) target = $region20
        $region19: #{tpu_custom_call.1} parent=15 // pred_region
          %s154 = sand.u32 %s54, 1
          %s155 = scalar_lea.sflag [#allocation4], %s154
          %s156 = sand.u32 %s54, 1
          %s157 = smul.addr %s156, 8
          %s158 = scalar_lea.vmem [#allocation3], %s157
          %s159 = sadd.s32 %s25, %s26
          %p160 = scmp.lt.s32.totalorder %s159, 0
          %s161 = scalar_select %p160, %s159, 0
          %s162 = smul.u32 2, %s161
          %s164 = ssub.s32 128, 128
          %165 = vsyncadd %s155, %s164
          %s166 = smul.addr %s24, 2
          %s167 = sadd.s32 %s162, %s166
          %s168 = smul.addr %s167, 64
          %s169 = scalar_lea.hbm %s0, %s168
          %s171 = sshll.u32 %s158, 4
          %s172 = int_to_ptr.vmem [resolvable:$true] %s171
          %174 = dma.hbm_to_vmem [thread:$0]  %s169, 128, %s172, %s155
        $region20: #{tpu_custom_call.1} parent=15 // pred_fallthru
          _
        // Predicated region
        $region21: #{tpu_custom_call.1} parent=15 // pred_check
          %p175 = pneg %p98
        $region22: #{tpu_custom_call.1} parent=15 // pred_check_branch
          %177 = sbr.rel (%p175) target = $region24
        $region23: #{tpu_custom_call.1} parent=15 // pred_region
          %s178 = sand.u32 %s88, 1
          %s179 = scalar_lea.sflag [#allocation7], %s178
          %s180 = sand.u32 %s88, 1
          %s181 = smul.addr %s180, 2
          %s182 = scalar_lea.vmem [#allocation6], %s181
          %s183 = sadd.s32 %s25, %s26
          %p184 = scmp.lt.s32.totalorder %s183, 0
          %s185 = scalar_select %p184, %s183, 0
          %s186 = smul.u32 2, %s185
          %s188 = ssub.s32 32, 32
          %189 = vsyncadd %s179, %s188
          %s190 = smul.addr %s24, 2
          %s191 = sadd.s32 %s186, %s190
          %s192 = smul.addr %s191, 16
          %s193 = scalar_lea.hbm %s1, %s192
          %s195 = sshll.u32 %s182, 4
          %s196 = int_to_ptr.vmem [resolvable:$true] %s195
          %198 = dma.hbm_to_vmem [thread:$0]  %s193, 32, %s196, %s179
        $region24: #{tpu_custom_call.1} parent=15 // pred_fallthru
          _
      $region16: #{tpu_custom_call.1} parent=5 // pred_fallthru
        _
      %p199 = scmp.le.s32.totalorder 1, %s17
      %p200 = scmp.lt.s32.totalorder %s17, 3
      %p201 = pnand %p199, %p200
      %p202 = pneg %p201
      // Predicated region
      $region25: #{tpu_custom_call.1} parent=5 // pred_check
        _
      $region26: #{tpu_custom_call.1} parent=5 // pred_check_branch
        %204 = sbr.rel (%p201) target = $region28
      $region27: #{tpu_custom_call.1} parent=5 // pred_region
        %s205 = ssub.s32 %s17, 1
        %s206 = sand.u32 %s57, 1
        %s207 = scalar_lea.sflag [#allocation4], %s206
        %s208 = sand.u32 %s57, 1
        %s209 = smul.addr %s208, 8
        %s210 = scalar_lea.vmem [#allocation3], %s209
        // Predicated region
        $region29: #{tpu_custom_call.1} parent=27 // pred_check
          %p211 = pneg %p70
        $region30: #{tpu_custom_call.1} parent=27 // pred_check_branch
          %213 = sbr.rel (%p211) target = $region32
        $region31: #{tpu_custom_call.1} parent=27 // pred_region
          %214 = dma.done %s207, 128
        $region32: #{tpu_custom_call.1} parent=27 // pred_fallthru
          _
        %s215 = sand.u32 %s91, 1
        %s216 = scalar_lea.sflag [#allocation7], %s215
        %s217 = sand.u32 %s91, 1
        %s218 = smul.addr %s217, 2
        %s219 = scalar_lea.vmem [#allocation6], %s218
        // Predicated region
        $region33: #{tpu_custom_call.1} parent=27 // pred_check
          %p220 = pneg %p104
        $region34: #{tpu_custom_call.1} parent=27 // pred_check_branch
          %222 = sbr.rel (%p220) target = $region36
        $region35: #{tpu_custom_call.1} parent=27 // pred_region
          %223 = dma.done %s216, 32
        $region36: #{tpu_custom_call.1} parent=27 // pred_fallthru
          _
        %s224 = sand.u32 %s57, 1
        %s225 = scalar_lea.sflag [#allocation4], %s224
        %s226 = sand.u32 %s57, 1
        %s227 = smul.addr %s226, 8
        %s228 = scalar_lea.vmem [#allocation3], %s227
        %p229 = pneg %p70
        %p230 = pneg %p67
        %s231 = sand.u32 %s91, 1
        %s232 = scalar_lea.sflag [#allocation7], %s231
        %s233 = sand.u32 %s91, 1
        %s234 = smul.addr %s233, 2
        %s235 = scalar_lea.vmem [#allocation6], %s234
        %p236 = pneg %p104
        %p237 = pneg %p101
        %p238 = pneg %p132
        %p239 = pneg %p129
        %s240 = sand.u32 %s119, 1
        %s241 = scalar_lea.sflag [#allocation5], %s240
        %s242 = sand.u32 %s119, 1
        %s243 = scalar_lea.vmem [#allocation8], %s242
        %s244 = sadd.s32 %s28, %s29
        %p245 = scmp.lt.s32.totalorder %s244, 0
        %s246 = scalar_select %p245, %s244, 0
        %s247 = smul.u32 2, %s246
        %s248 = sadd.s32 %s28, %s29
        %p249 = scmp.lt.s32.totalorder %s248, 0
        %s250 = scalar_select %p249, %s248, 0
        %s251 = smul.u32 2, %s250
        %s252 = sadd.s32 %s27, %s28
        %p253 = scmp.eq.s32.totalorder %s29, 0
        // Predicated region
        $region37: #{tpu_custom_call.1} parent=27 // pred_check
          %p254 = pneg %p253
        $region38: #{tpu_custom_call.1} parent=27 // pred_check_branch
          %256 = sbr.rel (%p254) target = $region40
        $region39: #{tpu_custom_call.1} parent=27 // pred_region
          %v257 = vlaneseq
          %vm258 = vcmp.ge.s32.totalorder %v257, 0
          %vm259 = vcmp.lt.s32.totalorder %v257, 256
          %vm260 = vmand %vm258, %vm259
          %261 = vst.msk [vmem:[#allocation2] sm:$0x3] %vm260, 0.0
        $region40: #{tpu_custom_call.1} parent=27 // pred_fallthru
          _
        %v262 = vld [vmem:[%s210] sm:$0xff]
        %v263 = vld [vmem:[%s219] sm:$0x3]
        %s264 = sadd.s32 %s28, %s29
        %s265 = sadd.s32 %s264, 1
        %s266 = smul.u32 %s265, 256
        %p267 = scmp.gt.s32.totalorder %s266, 256
        %p268 = scmp.le.s32.totalorder %s266, 256
        // Predicated region
        $region41: #{tpu_custom_call.1} parent=27 // pred_check
          %p269 = pneg %p268
        $region42: #{tpu_custom_call.1} parent=27 // pred_check_branch
          %271 = sbr.rel (%p269) target = $region44
        $region43: #{tpu_custom_call.1} parent=27 // pred_region
          %v273 = vcombine.high %v262, %v262
          %vm275 = vcmask 1043456
          %v276 = vsel %vm275, %v262, -inf
          %v277 = vrot.slane %v276, 4
          %v278 = vmax.f32 %v276, %v277
          %v279 = vrot.slane %v278, 2
          %v280 = vmax.f32 %v278, %v279
          %v281 = vrot.slane %v280, 1
          %v282 = vmax.f32 %v280, %v281
          %v283 = vsel %vm275, %v273, -inf
          %v284 = vrot.slane %v283, 4
          %v285 = vmax.f32 %v283, %v284
          %v286 = vrot.slane %v285, 2
          %v287 = vmax.f32 %v285, %v286
          %v288 = vrot.slane %v287, 1
          %v289 = vmax.f32 %v287, %v288
          %v292 = vcombine.low %v282, %v289
          %v294 = vsub.f32 %v262, %v292
          %v295 = vmul.f32 %v294, 1.442695
          %v296 = vpow.pop %v295
          %v298 = vcombine.high %v296, %v296
          %v300 = vsel %vm275, %v296, 0.0
          %v301 = vrot.slane %v300, 4
          %v302 = vadd.f32 %v300, %v301
          %v303 = vrot.slane %v302, 2
          %v304 = vadd.f32 %v302, %v303
          %v305 = vrot.slane %v304, 1
          %v306 = vadd.f32 %v304, %v305
          %v307 = vsel %vm275, %v298, 0.0
          %v308 = vrot.slane %v307, 4
          %v309 = vadd.f32 %v307, %v308
          %v310 = vrot.slane %v309, 2
          %v311 = vadd.f32 %v309, %v310
          %v312 = vrot.slane %v311, 1
          %v313 = vadd.f32 %v311, %v312
          %v314 = vlog2.pop %v306
          %v315 = vmul.f32 %v314, 0.6931472
          %v316 = vlog2.pop %v313
          %v317 = vmul.f32 %v316, 0.6931472
          %v318 = vadd.f32 %v315, %v282
          %v319 = vadd.f32 %v317, %v289
          %v320 = vlaneseq
          %v321 = vshrl.u32 %v320, 7
          %v322 = vlaneseq
          %v323 = vshrl.u32 %v322, 7
          %v324 = vsub.s32 0, %v323
          %v325 = vrot.slane %v263, %v324
          %v326 = vlaneseq
          %v327 = vshrl.u32 %v326, 7
          %v328 = vsub.s32 1, %v327
          %v329 = vrot.slane %v263, %v328
          %vm330 = vcmp.eq.s32.totalorder %v321, %v325
          %vm331 = vcmp.eq.s32.totalorder %v321, %v329
          %v332 = vsel %vm330, %v262, 0.0
          %v333 = vsel %vm331, %v273, 0.0
          %v334 = vsel %vm275, %v332, 0.0
          %v335 = vrot.slane %v334, 4
          %v336 = vadd.f32 %v334, %v335
          %v337 = vrot.slane %v336, 2
          %v338 = vadd.f32 %v336, %v337
          %v339 = vrot.slane %v338, 1
          %v340 = vadd.f32 %v338, %v339
          %v341 = vsel %vm275, %v333, 0.0
          %v342 = vrot.slane %v341, 4
          %v343 = vadd.f32 %v341, %v342
          %v344 = vrot.slane %v343, 2
          %v345 = vadd.f32 %v343, %v344
          %v346 = vrot.slane %v345, 1
          %v347 = vadd.f32 %v345, %v346
          %vm348 = vcmp.ne.s32.totalorder %v263, 4294967295
          %v349 = vld [vmem:[#allocation2] sm:$0x3]
          %v350 = vsub.f32 %v318, %v340
          %v351 = vsub.f32 %v319, %v347
          %v354 = vcombine.low %v350, %v351
          %v356 = vunpack.c.l.s4 1966171168
          %v357 = vunpack.c.0.s8 %v356
          %v358 = vlaneseq
          %v359 = vshrl.u32 %v358, 7
          %v360 = vsub.s32 %v357, %v359
          %v361 = vrot.slane %v354, %v360
          %v363 = vunpack.c.l.s4 1966171168
          %v364 = vunpack.c.0.s8 %v363
          %v365 = vlaneseq
          %v366 = vshrl.u32 %v365, 7
          %v367 = vsub.s32 %v364, %v366
          %v368 = vrot.slane %v361, %v367
          %v370 = vsel %vm348, %v368, 0.0
          %v371 = vadd.f32 %v349, %v370
          %v372 = vlaneseq
          %vm373 = vcmp.ge.s32.totalorder %v372, 0
          %vm374 = vcmp.lt.s32.totalorder %v372, 256
          %vm375 = vmand %vm373, %vm374
          %376 = vst.msk [vmem:[#allocation2] sm:$0x3] %vm375, %v371
        $region44: #{tpu_custom_call.1} parent=27 // pred_fallthru
          _
        // Predicated region
        $region45: #{tpu_custom_call.1} parent=27 // pred_check
          %p377 = pneg %p267
        $region46: #{tpu_custom_call.1} parent=27 // pred_check_branch
          %379 = sbr.rel (%p377) target = $region48
        $region47: #{tpu_custom_call.1} parent=27 // pred_region
          %s380 = smul.u32 %s264, 256
          %v381 = vlaneseq
          %v382 = vand.u32 %v381, 127
          %v383 = vadd.s32 %v382, 128
          %v384 = vstv %s380
          %v385 = vadd.s32 %v384, %v382
          %v386 = vadd.s32 %v384, %v383
          %vm387 = vcmp.lt.s32.totalorder %v385, 256
          %vm388 = vcmp.lt.s32.totalorder %v386, 256
          %v389 = vsel %vm387, 1, 0
          %v390 = vsel %vm388, 1, 0
          %vm391 = vcmp.eq.s32.totalorder %v389, 1
          %vm392 = vcmp.eq.s32.totalorder %v390, 1
          %v394 = vcombine.high %v262, %v262
          %v396 = vsel %vm391, %v262, 0.0
          %v397 = vsel %vm392, %v394, 0.0
          %vm398 = vcmask 1043456
          %v399 = vsel %vm398, %v396, -inf
          %v400 = vrot.slane %v399, 4
          %v401 = vmax.f32 %v399, %v400
          %v402 = vrot.slane %v401, 2
          %v403 = vmax.f32 %v401, %v402
          %v404 = vrot.slane %v403, 1
          %v405 = vmax.f32 %v403, %v404
          %v406 = vsel %vm398, %v397, -inf
          %v407 = vrot.slane %v406, 4
          %v408 = vmax.f32 %v406, %v407
          %v409 = vrot.slane %v408, 2
          %v410 = vmax.f32 %v408, %v409
          %v411 = vrot.slane %v410, 1
          %v412 = vmax.f32 %v410, %v411
          %v413 = vsub.f32 %v396, %v405
          %v414 = vsub.f32 %v397, %v412
          %v415 = vmul.f32 %v413, 1.442695
          %v416 = vpow.pop %v415
          %v417 = vmul.f32 %v414, 1.442695
          %v418 = vpow.pop %v417
          %v419 = vsel %vm398, %v416, 0.0
          %v420 = vrot.slane %v419, 4
          %v421 = vadd.f32 %v419, %v420
          %v422 = vrot.slane %v421, 2
          %v423 = vadd.f32 %v421, %v422
          %v424 = vrot.slane %v423, 1
          %v425 = vadd.f32 %v423, %v424
          %v426 = vsel %vm398, %v418, 0.0
          %v427 = vrot.slane %v426, 4
          %v428 = vadd.f32 %v426, %v427
          %v429 = vrot.slane %v428, 2
          %v430 = vadd.f32 %v428, %v429
          %v431 = vrot.slane %v430, 1
          %v432 = vadd.f32 %v430, %v431
          %v433 = vlog2.pop %v425
          %v434 = vmul.f32 %v433, 0.6931472
          %v435 = vlog2.pop %v432
          %v436 = vmul.f32 %v435, 0.6931472
          %v437 = vadd.f32 %v434, %v405
          %v438 = vadd.f32 %v436, %v412
          %v439 = vlaneseq
          %v440 = vshrl.u32 %v439, 7
          %v441 = vlaneseq
          %v442 = vshrl.u32 %v441, 7
          %v443 = vsub.s32 0, %v442
          %v444 = vrot.slane %v263, %v443
          %v445 = vlaneseq
          %v446 = vshrl.u32 %v445, 7
          %v447 = vsub.s32 1, %v446
          %v448 = vrot.slane %v263, %v447
          %vm449 = vcmp.eq.s32.totalorder %v440, %v444
          %vm450 = vcmp.eq.s32.totalorder %v440, %v448
          %v451 = vsel %vm449, %v396, 0.0
          %v452 = vsel %vm450, %v397, 0.0
          %v453 = vsel %vm398, %v451, 0.0
          %v454 = vrot.slane %v453, 4
          %v455 = vadd.f32 %v453, %v454
          %v456 = vrot.slane %v455, 2
          %v457 = vadd.f32 %v455, %v456
          %v458 = vrot.slane %v457, 1
          %v459 = vadd.f32 %v457, %v458
          %v460 = vsel %vm398, %v452, 0.0
          %v461 = vrot.slane %v460, 4
          %v462 = vadd.f32 %v460, %v461
          %v463 = vrot.slane %v462, 2
          %v464 = vadd.f32 %v462, %v463
          %v465 = vrot.slane %v464, 1
          %v466 = vadd.f32 %v464, %v465
          %vm467 = vcmp.ne.s32.totalorder %v263, 4294967295
          %v468 = vcombine.low %v389, %v390
          %v470 = vunpack.c.l.s4 1966171168
          %v471 = vunpack.c.0.s8 %v470
          %v472 = vlaneseq
          %v473 = vshrl.u32 %v472, 7
          %v474 = vsub.s32 %v471, %v473
          %v475 = vrot.slane %v468, %v474
          %v477 = vunpack.c.l.s4 1966171168
          %v478 = vunpack.c.0.s8 %v477
          %v479 = vlaneseq
          %v480 = vshrl.u32 %v479, 7
          %v481 = vsub.s32 %v478, %v480
          %v482 = vrot.slane %v475, %v481
          %vm483 = vcmp.ne.s32.totalorder %v482, 0
          %vm484 = vmand %vm467, %vm483
          %v485 = vld [vmem:[#allocation2] sm:$0x3]
          %v486 = vsub.f32 %v437, %v459
          %v487 = vsub.f32 %v438, %v466
          %v490 = vcombine.low %v486, %v487
          %v492 = vunpack.c.l.s4 1966171168
          %v493 = vunpack.c.0.s8 %v492
          %v494 = vlaneseq
          %v495 = vshrl.u32 %v494, 7
          %v496 = vsub.s32 %v493, %v495
          %v497 = vrot.slane %v490, %v496
          %v499 = vunpack.c.l.s4 1966171168
          %v500 = vunpack.c.0.s8 %v499
          %v501 = vlaneseq
          %v502 = vshrl.u32 %v501, 7
          %v503 = vsub.s32 %v500, %v502
          %v504 = vrot.slane %v497, %v503
          %v506 = vsel %vm484, %v504, 0.0
          %v507 = vadd.f32 %v485, %v506
          %v508 = vlaneseq
          %vm509 = vcmp.ge.s32.totalorder %v508, 0
          %vm510 = vcmp.lt.s32.totalorder %v508, 256
          %vm511 = vmand %vm509, %vm510
          %512 = vst.msk [vmem:[#allocation2] sm:$0x3] %vm511, %v507
        $region48: #{tpu_custom_call.1} parent=27 // pred_fallthru
          _
        // Predicated region
        $region49: #{tpu_custom_call.1} parent=27 // pred_check
          %p513 = pneg %p253
        $region50: #{tpu_custom_call.1} parent=27 // pred_check_branch
          %515 = sbr.rel (%p513) target = $region52
        $region51: #{tpu_custom_call.1} parent=27 // pred_region
          %v516 = vld [vmem:[#allocation2] sm:$0x3]
          %v518 = vlaneseq
          %v519 = vshrl.u32 %v518, 7
          %v520 = vsub.s32 0, %v519
          %v521 = vrot.slane %v516, %v520
          %v522 = vlaneseq
          %v523 = vshrl.u32 %v522, 7
          %v524 = vsub.s32 1, %v523
          %v525 = vrot.slane %v516, %v524
          %vm528 = vcmask 1040384
          %v529 = vsel %vm528, %v521, 0.0
          %v530 = vsel %vm528, %v525, 0.0
          %v531 = vadd.f32 %v529, %v530
          %532 = vadd.xlane.f32.xlu0 %v531
          %v533 = vpop.xlane.xlu0 %532
          %v534 = vrot.slane %v533, 4
          %v535 = vadd.f32 %v533, %v534
          %v536 = vrot.slane %v535, 2
          %v537 = vadd.f32 %v535, %v536
          %v538 = vrot.slane %v537, 1
          %v539 = vadd.f32 %v537, %v538
          %s540 = vtos %v539
          %v541 = vstv %s540
          %542 = vst [vmem:[%s243] sm:$0x1] %v541
        $region52: #{tpu_custom_call.1} parent=27 // pred_fallthru
          _
        %s543 = sand.u32 %s119, 1
        %s544 = scalar_lea.sflag [#allocation5], %s543
        %s545 = sand.u32 %s119, 1
        %s546 = scalar_lea.vmem [#allocation8], %s545
        // Predicated region
        $region53: #{tpu_custom_call.1} parent=27 // pred_check
          %p547 = pneg %p129
        $region54: #{tpu_custom_call.1} parent=27 // pred_check_branch
          %549 = sbr.rel (%p547) target = $region56
        $region55: #{tpu_custom_call.1} parent=27 // pred_region
          %s550 = sadd.s32 %s27, %s28
          %s552 = ssub.s32 16, 16
          %553 = vsyncadd %s544, %s552
          %s554 = smul.addr %s550, 16
          %s555 = scalar_lea.hbm %s2, %s554
          %s557 = sshll.u32 %s546, 4
          %s558 = int_to_ptr.vmem [resolvable:$true] %s557
          %560 = dma.vmem_to_hbm [thread:$0]  %s558, 16, %s555, %s544
        $region56: #{tpu_custom_call.1} parent=27 // pred_fallthru
          _
      $region28: #{tpu_custom_call.1} parent=5 // pred_fallthru
        _
      %p561 = scmp.le.s32.totalorder 2, %s17
      // Predicated region
      $region57: #{tpu_custom_call.1} parent=5 // pred_check
        %p562 = pneg %p561
      $region58: #{tpu_custom_call.1} parent=5 // pred_check_branch
        %564 = sbr.rel (%p562) target = $region60
      $region59: #{tpu_custom_call.1} parent=5 // pred_region
        %s565 = ssub.s32 %s17, 2
        // Predicated region
        $region61: #{tpu_custom_call.1} parent=59 // pred_check
          %p566 = pneg %p135
        $region62: #{tpu_custom_call.1} parent=59 // pred_check_branch
          %568 = sbr.rel (%p566) target = $region64
        $region63: #{tpu_custom_call.1} parent=59 // pred_region
          %s569 = sand.u32 %s120, 1
          %s570 = scalar_lea.sflag [#allocation5], %s569
          %s571 = sand.u32 %s120, 1
          %s572 = scalar_lea.vmem [#allocation8], %s571
          %573 = dma.done %s570, 16
        $region64: #{tpu_custom_call.1} parent=59 // pred_fallthru
          _
      $region60: #{tpu_custom_call.1} parent=5 // pred_fallthru
        _
    $region6: #{tpu_custom_call.1} parent=1 // loop_footer
      %s21 = sadd.s32 1, %s17
    $region7: #{tpu_custom_call.1} parent=1 // loop_footer_branch
      %16 = sbr.rel target = $region3
    $region8: #{tpu_custom_call.1} parent=1 // loop_exit
      _
    %574 = vsyncpa [#allocation4], 1
    %s575 = scalar_lea.sflag [#allocation4], 1
    %576 = vsyncpa %s575, 1
    %577 = vsyncpa [#allocation7], 1
    %s578 = scalar_lea.sflag [#allocation7], 1
    %579 = vsyncpa %s578, 1
    %580 = vsyncpa [#allocation5], 1
    %s581 = scalar_lea.sflag [#allocation5], 1
    %582 = vsyncpa %s581, 1

</llo_original>
